<compile_context>
chip_gen: v6e
topology: v6e:2x2x1
jax: 0.10.0
libtpu: 0.0.40
codegen_flags: <defaults>
</compile_context>

<pallas_src>
import math

import jax
import jax.numpy as jnp
from jax.experimental import pallas as pl
from jax.experimental.pallas import tpu as pltpu


def _round_up(x, m):
    return ((x + m - 1) // m) * m


def _pick_tile(n_pad, desired):
    """Largest multiple of 128 that divides n_pad and is <= desired (>= 128)."""
    desired = max(128, min(desired, n_pad))
    best, t = 128, 128
    while t <= desired:
        if n_pad % t == 0:
            best = t
        t += 128
    return best


def _vmem_cap_bytes():
    """Generation-aware VMEM budget: ~75% of physical per-core VMEM."""
    try:
        phys = int(pltpu.get_tpu_info().vmem_capacity_bytes)  # 128 MiB v5e/v6e, 64 MiB v7x
    except Exception:
        phys = 64 << 20  # conservative fallback: assume v7x-class 64 MiB
    return max(32 << 20, min((phys * 3) // 4, 112 << 20))


def _vmem_limit(need, cap):
    return int(min(cap, max(need + need // 4 + (4 << 20), 16 << 20)))


# ---------------------------------------------------------------------------
# Kernel 1: support = X @ W   (small: N x D_in x D_out, computed exactly once)
# ---------------------------------------------------------------------------
def _xw_kernel(x_ref, w_ref, s_ref, acc_ref):
    k = pl.program_id(1)

    @pl.when(k == 0)
    def _():
        acc_ref[...] = jnp.zeros_like(acc_ref)

    acc_ref[...] += jnp.dot(x_ref[...], w_ref[...],
                            preferred_element_type=jnp.float32)

    @pl.when(k == pl.num_programs(1) - 1)
    def _():
        s_ref[...] = acc_ref[...].astype(s_ref.dtype)


def _compute_support(x_p, w_p, *, vmem_cap):
    N_p, D_in_p = x_p.shape
    D_out_p = w_p.shape[1]
    itemsize = x_p.dtype.itemsize

    ts = _pick_tile(N_p, 512)
    tki = _pick_tile(D_in_p, 512)

    def need(ts_, tki_):
        return (2 * ts_ * tki_ * itemsize          # X tiles (double-buffered)
                + 2 * tki_ * D_out_p * itemsize    # W tiles
                + 2 * ts_ * D_out_p * itemsize     # S (output) tiles
                + ts_ * D_out_p * 4)               # f32 accumulator scratch

    while need(ts, tki) > (vmem_cap * 9) // 10:
        if tki >= ts and tki > 128:
            tki = _pick_tile(D_in_p, tki // 2)
        elif ts > 128:
            ts = _pick_tile(N_p, ts // 2)
        else:
            break

    grid = (N_p // ts, D_in_p // tki)
    return pl.pallas_call(
        _xw_kernel,
        out_shape=jax.ShapeDtypeStruct((N_p, D_out_p), x_p.dtype),
        grid_spec=pltpu.PrefetchScalarGridSpec(
            num_scalar_prefetch=0,
            grid=grid,
            in_specs=[
                pl.BlockSpec((ts, tki), lambda i, k: (i, k)),        # X
                pl.BlockSpec((tki, D_out_p), lambda i, k: (k, 0)),   # W
            ],
            out_specs=pl.BlockSpec((ts, D_out_p), lambda i, k: (i, 0)),
            scratch_shapes=[pltpu.VMEM((ts, D_out_p), jnp.float32)],
        ),
        compiler_params=pltpu.CompilerParams(
            dimension_semantics=("parallel", "arbitrary"),
            vmem_limit_bytes=_vmem_limit(need(ts, tki), vmem_cap),
        ),
    )(x_p, w_p)


# ---------------------------------------------------------------------------
# Kernel 2: output = A @ S + bias   (dominant HBM stream: the N^2 adjacency)
# ---------------------------------------------------------------------------
def _gcn_spmm_kernel(adj_ref, s_ref, b_ref, out_ref):
    # out_ref's block index is constant over the reduction axis k, so the f32
    # output block stays resident in VMEM across k and doubles as the
    # accumulator (no separate scratch, no extra VMEM->VMEM copy).
    k = pl.program_id(1)

    @pl.when(k == 0)
    def _():
        out_ref[...] = jnp.zeros_like(out_ref)

    out_ref[...] += jnp.dot(adj_ref[...], s_ref[...],
                            preferred_element_type=jnp.float32)

    @pl.when(k == pl.num_programs(1) - 1)
    def _():
        out_ref[...] += b_ref[...]            # (1, D_out_p) broadcasts over rows


def graph_convolution(adjacency, input_feature, weight, bias=None, *,
                      block_rows=1024, block_k=1024, stream_dtype=None):
    """Pallas GCN forward: A @ (X @ W) + b, tiled and pipelined on TPU."""
    N, D_in = input_feature.shape
    assert adjacency.shape == (N, N)
    D_out = weight.shape[1]
    out_dtype = input_feature.dtype

    # Stream dtype of the dominant A pass defaults to A's own dtype so that no
    # extra N^2 cast pass is paid.  Only request bf16 when A is bf16 upstream
    # or the cast is amortized across layers.
    stream_dt = (jnp.dtype(stream_dtype) if stream_dtype is not None
                 else jnp.dtype(adjacency.dtype))
    itemsize = stream_dt.itemsize

    vmem_cap = _vmem_cap_bytes()

    # Lane-dense feature padding (128).  Typical wide hidden sizes (>=256,
    # powers of two) are already 256-multiples for the v6e/v7x MXU; small
    # D_out is deliberately NOT padded past 128 (kernel is A-bandwidth bound).
    D_in_p = _round_up(D_in, 128)
    D_out_p = _round_up(D_out, 128)

    # Minimal (128) alignment of the node dimension; zero-copy when aligned.
    N_p = _round_up(N, 128)

    # Tiles: multiples of 128 that divide N_p (exact grid), as large as the
    # VMEM budget allows (amortizes ~0.35us per grid step on a mem-bound pass).
    tm = _pick_tile(N_p, block_rows)
    tk = _pick_tile(N_p, block_k)
    # Give both v7x TensorCores work on the "parallel" row axis when possible.
    if N_p // tm < 2 and N_p >= 2 * 128:
        tm = _pick_tile(N_p, N_p // 2)

    def a_pass_need(tm_, tk_):
        return (2 * tm_ * tk_ * itemsize           # A tiles (double-buffered)
                + 2 * tk_ * D_out_p * itemsize     # S tiles
                + 2 * D_out_p * 4                  # bias (tiny)
                + 2 * tm_ * D_out_p * 4)           # f32 output/accumulator tiles

    while a_pass_need(tm, tk) > (vmem_cap * 9) // 10:
        if tk >= tm and tk > 128:
            tk = _pick_tile(N_p, tk // 2)
        elif tm > 128:
            tm = _pick_tile(N_p, tm // 2)
        else:
            break

    # A: zero-copy when already aligned and in the stream dtype; otherwise a
    # minimal pad to the next 128 multiple (see TODO on in-kernel edge masking).
    if N_p == N and adjacency.dtype == stream_dt:
        adj_p = adjacency
    else:
        adj_p = jnp.pad(adjacency.astype(stream_dt),
                        ((0, N_p - N), (0, N_p - N)))

    # X / W / bias are small; zero-padding them is cheap and contributes exact
    # zeros, so padded support rows are exactly zero.
    x_p = jnp.pad(input_feature.astype(stream_dt),
                  ((0, N_p - N), (0, D_in_p - D_in)))
    w_p = jnp.pad(weight.astype(stream_dt),
                  ((0, D_in_p - D_in), (0, D_out_p - D_out)))
    if bias is None:
        b_p = jnp.zeros((1, D_out_p), dtype=jnp.float32)
    else:
        b_p = jnp.pad(bias.astype(jnp.float32).reshape(1, D_out),
                      ((0, 0), (0, D_out_p - D_out)))

    # support = X @ W, computed exactly once (not per row tile of A).
    s_p = _compute_support(x_p, w_p, vmem_cap=vmem_cap)

    grid = (N_p // tm, N_p // tk)
    out_p = pl.pallas_call(
        _gcn_spmm_kernel,
        out_shape=jax.ShapeDtypeStruct((N_p, D_out_p), jnp.float32),
        grid_spec=pltpu.PrefetchScalarGridSpec(
            num_scalar_prefetch=0,
            grid=grid,
            in_specs=[
                pl.BlockSpec((tm, tk), lambda i, k: (i, k)),          # A (dominant stream)
                pl.BlockSpec((tk, D_out_p), lambda i, k: (k, 0)),     # support S rows
                pl.BlockSpec((1, D_out_p), lambda i, k: (0, 0)),      # bias (tiny, resident)
            ],
            out_specs=pl.BlockSpec((tm, D_out_p), lambda i, k: (i, 0)),
        ),
        compiler_params=pltpu.CompilerParams(
            dimension_semantics=("parallel", "arbitrary"),
            vmem_limit_bytes=_vmem_limit(a_pass_need(tm, tk), vmem_cap),
        ),
    )(adj_p, s_p, b_p)

    return out_p[:N, :D_out].astype(out_dtype)


def init_gcn_params(key, input_dim, output_dim, use_bias=True, dtype=jnp.float32):
    """Matches reset_parameters(): kaiming_uniform_ weight, zero bias.

    torch.nn.init.kaiming_uniform_ on an (input_dim, output_dim) tensor uses
    fan_in = size(1) = output_dim, gain = sqrt(2) => bound = sqrt(6/output_dim).
    """
    bound = math.sqrt(6.0 / output_dim)
    weight = jax.random.uniform(
        key, (input_dim, output_dim), dtype=dtype, minval=-bound, maxval=bound)
    bias = jnp.zeros((output_dim,), dtype=dtype) if use_bias else None
    return weight, bias


def _make_norm_adj(key, n):
    """Synthetic normalized adjacency D^-1/2 (A + I) D^-1/2 (dense stand-in)."""
    raw = jax.random.uniform(key, (n, n), dtype=jnp.float32)
    adj = (raw > 0.8).astype(jnp.float32)
    adj = adj + adj.T + jnp.eye(n, dtype=jnp.float32)
    adj = jnp.minimum(adj, 1.0)
    deg = jnp.sum(adj, axis=1)
    d_inv_sqrt = 1.0 / jnp.sqrt(deg)
    return adj * d_inv_sqrt[:, None] * d_inv_sqrt[None, :]


if __name__ == "__main__":
    key = jax.random.PRNGKey(0)
    keys = jax.random.split(key, 9)

    # --- demo 1: small shapes (single tile after minimal padding) -----------
    N, d_in, d_out = 64, 32, 16
    adj = _make_norm_adj(keys[0], N)
    x = jax.random.normal(keys[1], (N, d_in), dtype=jnp.float32)
    w, b = init_gcn_params(keys[2], d_in, d_out, use_bias=True)

    out = jax.block_until_ready(graph_convolution(adj, x, w, b))
    ref = adj @ (x @ w) + b[None, :]
    assert out.shape == (N, d_out)
    assert jnp.allclose(out, ref, atol=1e-4, rtol=1e-4)

    # --- demo 2: unaligned N + multi-tile (i, k) grid exercising the --------
    # --- in-VMEM accumulation, bias finalize, and the padding path ----------
    N2, d_in2, d_out2 = 200, 48, 24
    adj2 = _make_norm_adj(keys[3], N2)
    x2 = jax.random.normal(keys[4], (N2, d_in2), dtype=jnp.float32)
    w2, b2 = init_gcn_params(keys[5], d_in2, d_out2, use_bias=True)

    out2 = jax.block_until_ready(
        graph_convolution(adj2, x2, w2, b2, block_rows=128, block_k=128))
    ref2 = adj2 @ (x2 @ w2) + b2[None, :]
    assert out2.shape == (N2, d_out2)
    assert jnp.allclose(out2, ref2, atol=1e-3, rtol=1e-3)

    # --- demo 3: 128-aligned N -> zero-copy adjacency path, no bias ---------
    N3, d_in3, d_out3 = 256, 64, 32
    adj3 = _make_norm_adj(keys[6], N3)
    x3 = jax.random.normal(keys[7], (N3, d_in3), dtype=jnp.float32)
    w3, _ = init_gcn_params(keys[8], d_in3, d_out3, use_bias=False)

    out3 = jax.block_until_ready(graph_convolution(adj3, x3, w3, None))
    ref3 = adj3 @ (x3 @ w3)
    assert out3.shape == (N3, d_out3)
    assert jnp.allclose(out3, ref3, atol=1e-3, rtol=1e-3)

    print("KERNEL_OK")
</pallas_src>

<mosaic_0001>
module attributes {stable_mosaic.version = 11 : i64} {
  func.func @_xw_kernel(%arg0: i32, %arg1: i32, %arg2: memref<128x128xf32, #tpu.memory_space<vmem>>, %arg3: memref<128x128xf32, #tpu.memory_space<vmem>>, %arg4: memref<128x128xf32, #tpu.memory_space<vmem>>, %arg5: memref<128x128xf32, #tpu.memory_space<vmem>>) attributes {dimension_semantics = [#tpu.dimension_semantics<parallel>, #tpu.dimension_semantics<arbitrary>], iteration_bounds = array<i64: 1, 1>, scalar_prefetch = 0 : i64, scratch_operands = 1 : i64, tpu.core_type = #tpu.core_type<tc>, window_params = [{transform_indices = @transform_0, window_bounds = array<i64: 128, 128>}, {transform_indices = @transform_1, window_bounds = array<i64: 128, 128>}, {transform_indices = @transform_2, window_bounds = array<i64: 128, 128>}]} {
    %c0_i32 = arith.constant 0 : i32
    %0 = arith.cmpi eq, %arg1, %c0_i32 : i32
    %1 = arith.extui %0 : i1 to i32
    %c0_i32_0 = arith.constant 0 : i32
    %2 = arith.cmpi ne, %1, %c0_i32_0 : i32
    scf.if %2 {
      %cst_10 = arith.constant 0.000000e+00 : f32
      %12 = vector.broadcast %cst_10 : f32 to vector<128x128xf32>
      %c0_11 = arith.constant 0 : index
      %c0_12 = arith.constant 0 : index
      %13 = vector.load %arg5[%c0_11, %c0_12] : memref<128x128xf32, #tpu.memory_space<vmem>>, vector<128x128xf32>
      tpu.vector_store %arg5[%c0_11, %c0_12], %12 {strides = array<i32>} : memref<128x128xf32, #tpu.memory_space<vmem>>, vector<128x128xf32>,
    } else {
    }
    %c0 = arith.constant 0 : index
    %c0_1 = arith.constant 0 : index
    %3 = vector.load %arg5[%c0, %c0_1] : memref<128x128xf32, #tpu.memory_space<vmem>>, vector<128x128xf32>
    %c0_2 = arith.constant 0 : index
    %c0_3 = arith.constant 0 : index
    %4 = vector.load %arg2[%c0_2, %c0_3] : memref<128x128xf32, #tpu.memory_space<vmem>>, vector<128x128xf32>
    %c0_4 = arith.constant 0 : index
    %c0_5 = arith.constant 0 : index
    %5 = vector.load %arg3[%c0_4, %c0_5] : memref<128x128xf32, #tpu.memory_space<vmem>>, vector<128x128xf32>
    %cst = arith.constant dense<0.000000e+00> : vector<128x128xf32>
    %6 = tpu.matmul %4, %5, %cst {dimension_numbers = #tpu.dot_dimension_numbers<[1], [0], [0], [1], [0, 0, 1, 1], [], []>} : vector<128x128xf32>, vector<128x128xf32>, vector<128x128xf32> -> vector<128x128xf32>
    %7 = arith.addf %3, %6 : vector<128x128xf32>
    %c0_6 = arith.constant 0 : index
    %c0_7 = arith.constant 0 : index
    %8 = vector.load %arg5[%c0_6, %c0_7] : memref<128x128xf32, #tpu.memory_space<vmem>>, vector<128x128xf32>
    tpu.vector_store %arg5[%c0_6, %c0_7], %7 {strides = array<i32>} : memref<128x128xf32, #tpu.memory_space<vmem>>, vector<128x128xf32>,
    %c0_i32_8 = arith.constant 0 : i32
    %9 = arith.cmpi eq, %arg1, %c0_i32_8 : i32
    %10 = arith.extui %9 : i1 to i32
    %c0_i32_9 = arith.constant 0 : i32
    %11 = arith.cmpi ne, %10, %c0_i32_9 : i32
    scf.if %11 {
      %c0_10 = arith.constant 0 : index
      %c0_11 = arith.constant 0 : index
      %12 = vector.load %arg5[%c0_10, %c0_11] : memref<128x128xf32, #tpu.memory_space<vmem>>, vector<128x128xf32>
      %c0_12 = arith.constant 0 : index
      %c0_13 = arith.constant 0 : index
      %13 = vector.load %arg4[%c0_12, %c0_13] : memref<128x128xf32, #tpu.memory_space<vmem>>, vector<128x128xf32>
      tpu.vector_store %arg4[%c0_12, %c0_13], %12 {strides = array<i32>} : memref<128x128xf32, #tpu.memory_space<vmem>>, vector<128x128xf32>,
    } else {
    }
    return
  }
  func.func @transform_0(%arg0: i32, %arg1: i32) -> (i32, i32) {
    %c0_i32 = arith.constant 0 : i32
    return %arg0, %arg1 : i32, i32
  }
  func.func @transform_1(%arg0: i32, %arg1: i32) -> (i32, i32) {
    %c0_i32 = arith.constant 0 : i32
    %c0_i32_0 = arith.constant 0 : i32
    return %arg1, %c0_i32 : i32, i32
  }
  func.func @transform_2(%arg0: i32, %arg1: i32) -> (i32, i32) {
    %c0_i32 = arith.constant 0 : i32
    %c0_i32_0 = arith.constant 0 : i32
    return %arg0, %c0_i32 : i32, i32
  }
}

</mosaic_0001>

<llo_original>
// kernel: tpu_custom_call.1
$region0: #{tpu_custom_call.1}
  #allocation0 [shape = 'u32[]', space=smem, size = 0x4, offset = 0x4, fixed_abs, tag = 'smem constant byte address 0x4 - core index']
  #allocation1 [shape = 'u32[144,128]{1,0:T(1,128)}', space=vmem, size = 0x12000, scoped, tag = 'internal scratch']
  #allocation2 [shape = 'f32[128,128]{1,0:T(8,128)}', space=vmem, size = 0x10000, scoped, tag = 'scratch operand']
  %s0 = inlined_call_operand.hbm [shape: f32[128,128], index: 0, kind: input, shape index: {}]
  %s1 = inlined_call_operand.hbm [shape: f32[128,128], index: 1, kind: input, shape index: {}]
  %s2 = inlined_call_operand.hbm [shape: f32[128,128], index: 2, kind: output, shape index: {}]
  %s3 = sld [smem:[#allocation0]]
  $region34: #{tpu_custom_call.1} parent=0
    _
  %s5 = ssub.s32 1, %s3
  %s6 = scalar_select 0, %s5, %s3
  $region1: #{tpu_custom_call.1} parent=0
    #allocation3 [shape = 'u8[65536]{0}', space=vmem, size = 0x10000, scoped, tag = 'input window, operand 0, single buffered']
    #allocation4 [shape = 's32[1]{0}', space=sflag, size = 0x4, scoped, tag = 'scoped memory for tpu_custom_call.1']
    #allocation5 [shape = 's32[1]{0}', space=sflag, size = 0x4, scoped, tag = 'scoped memory for tpu_custom_call.1']
    #allocation6 [shape = 'u8[65536]{0}', space=vmem, size = 0x10000, scoped, tag = 'input window, operand 1, single buffered']
    #allocation7 [shape = 's32[1]{0}', space=sflag, size = 0x4, scoped, tag = 'scoped memory for tpu_custom_call.1']
    #allocation8 [shape = 'u8[65536]{0}', space=vmem, size = 0x10000, scoped, tag = 'output window, operand 0, single buffered']
    %7 = vsyncpa [#allocation4], 0
    %8 = vsyncpa [#allocation7], 0
    %9 = vsyncpa [#allocation5], 0
    // Predicated region
    $region2: #{tpu_custom_call.1} parent=1 // pred_check
      _
    $region3: #{tpu_custom_call.1} parent=1 // pred_check_branch
      %11 = sbr.rel (0) target = $region5
    $region4: #{tpu_custom_call.1} parent=1 // pred_region
      %s13 = ssub.s32 2048, 2048
      %14 = vsyncadd [#allocation4], %s13
      %s15 = sshll.u32 [#allocation3], 4
      %s16 = int_to_ptr.vmem [resolvable:$true] %s15
      %21 = dma.hbm_to_vmem [thread:$0]  %s0, 2048, %s16, [#allocation4], 128, 128, 8
    $region5: #{tpu_custom_call.1} parent=1 // pred_fallthru
      _
    // Predicated region
    $region6: #{tpu_custom_call.1} parent=1 // pred_check
      _
    $region7: #{tpu_custom_call.1} parent=1 // pred_check_branch
      %23 = sbr.rel (0) target = $region9
    $region8: #{tpu_custom_call.1} parent=1 // pred_region
      %s25 = ssub.s32 2048, 2048
      %26 = vsyncadd [#allocation7], %s25
      %s27 = sshll.u32 [#allocation6], 4
      %s28 = int_to_ptr.vmem [resolvable:$true] %s27
      %33 = dma.hbm_to_vmem [thread:$0]  %s1, 2048, %s28, [#allocation7], 128, 128, 8
    $region9: #{tpu_custom_call.1} parent=1 // pred_fallthru
      _
    // Predicated region
    $region10: #{tpu_custom_call.1} parent=1 // pred_check
      _
    $region11: #{tpu_custom_call.1} parent=1 // pred_check_branch
      %35 = sbr.rel (0) target = $region13
    $region12: #{tpu_custom_call.1} parent=1 // pred_region
      %36 = dma.done [#allocation4], 2048
    $region13: #{tpu_custom_call.1} parent=1 // pred_fallthru
      _
    // Predicated region
    $region14: #{tpu_custom_call.1} parent=1 // pred_check
      _
    $region15: #{tpu_custom_call.1} parent=1 // pred_check_branch
      %38 = sbr.rel (0) target = $region17
    $region16: #{tpu_custom_call.1} parent=1 // pred_region
      %39 = dma.done [#allocation7], 2048
    $region17: #{tpu_custom_call.1} parent=1 // pred_fallthru
      _
    %p40 = scmp.eq.s32.totalorder 0, 0
    // Predicated region
    $region18: #{tpu_custom_call.1} parent=1 // pred_check
      %p41 = pneg %p40
    $region19: #{tpu_custom_call.1} parent=1 // pred_check_branch
      %43 = sbr.rel (%p41) target = $region21
    $region20: #{tpu_custom_call.1} parent=1 // pred_region
      %44 = vst [vmem:[#allocation2] sm:$0xff] 0.0
      %45 = vst [vmem:[#allocation2 + $0x8] sm:$0xff] 0.0
      %46 = vst [vmem:[#allocation2 + $0x10] sm:$0xff] 0.0
      %47 = vst [vmem:[#allocation2 + $0x18] sm:$0xff] 0.0
      %48 = vst [vmem:[#allocation2 + $0x20] sm:$0xff] 0.0
      %49 = vst [vmem:[#allocation2 + $0x28] sm:$0xff] 0.0
      %50 = vst [vmem:[#allocation2 + $0x30] sm:$0xff] 0.0
      %51 = vst [vmem:[#allocation2 + $0x38] sm:$0xff] 0.0
      %52 = vst [vmem:[#allocation2 + $0x40] sm:$0xff] 0.0
      %53 = vst [vmem:[#allocation2 + $0x48] sm:$0xff] 0.0
      %54 = vst [vmem:[#allocation2 + $0x50] sm:$0xff] 0.0
      %55 = vst [vmem:[#allocation2 + $0x58] sm:$0xff] 0.0
      %56 = vst [vmem:[#allocation2 + $0x60] sm:$0xff] 0.0
      %57 = vst [vmem:[#allocation2 + $0x68] sm:$0xff] 0.0
      %58 = vst [vmem:[#allocation2 + $0x70] sm:$0xff] 0.0
      %59 = vst [vmem:[#allocation2 + $0x78] sm:$0xff] 0.0
    $region21: #{tpu_custom_call.1} parent=1 // pred_fallthru
      _
    %v60 = vld [vmem:[#allocation2] sm:$0xff]
    %v61 = vld [vmem:[#allocation2 + $0x8] sm:$0xff]
    %v62 = vld [vmem:[#allocation2 + $0x10] sm:$0xff]
    %v63 = vld [vmem:[#allocation2 + $0x18] sm:$0xff]
    %v64 = vld [vmem:[#allocation2 + $0x20] sm:$0xff]
    %v65 = vld [vmem:[#allocation2 + $0x28] sm:$0xff]
    %v66 = vld [vmem:[#allocation2 + $0x30] sm:$0xff]
    %v67 = vld [vmem:[#allocation2 + $0x38] sm:$0xff]
    %v68 = vld [vmem:[#allocation2 + $0x40] sm:$0xff]
    %v69 = vld [vmem:[#allocation2 + $0x48] sm:$0xff]
    %v70 = vld [vmem:[#allocation2 + $0x50] sm:$0xff]
    %v71 = vld [vmem:[#allocation2 + $0x58] sm:$0xff]
    %v72 = vld [vmem:[#allocation2 + $0x60] sm:$0xff]
    %v73 = vld [vmem:[#allocation2 + $0x68] sm:$0xff]
    %v74 = vld [vmem:[#allocation2 + $0x70] sm:$0xff]
    %v75 = vld [vmem:[#allocation2 + $0x78] sm:$0xff]
    %v76 = vld [vmem:[#allocation3] sm:$0xff]
    %v77 = vld [vmem:[#allocation3 + $0x8] sm:$0xff]
    %v78 = vld [vmem:[#allocation3 + $0x10] sm:$0xff]
    %v79 = vld [vmem:[#allocation3 + $0x18] sm:$0xff]
    %v80 = vld [vmem:[#allocation3 + $0x20] sm:$0xff]
    %v81 = vld [vmem:[#allocation3 + $0x28] sm:$0xff]
    %v82 = vld [vmem:[#allocation3 + $0x30] sm:$0xff]
    %v83 = vld [vmem:[#allocation3 + $0x38] sm:$0xff]
    %v84 = vld [vmem:[#allocation3 + $0x40] sm:$0xff]
    %v85 = vld [vmem:[#allocation3 + $0x48] sm:$0xff]
    %v86 = vld [vmem:[#allocation3 + $0x50] sm:$0xff]
    %v87 = vld [vmem:[#allocation3 + $0x58] sm:$0xff]
    %v88 = vld [vmem:[#allocation3 + $0x60] sm:$0xff]
    %v89 = vld [vmem:[#allocation3 + $0x68] sm:$0xff]
    %v90 = vld [vmem:[#allocation3 + $0x70] sm:$0xff]
    %v91 = vld [vmem:[#allocation3 + $0x78] sm:$0xff]
    %v92 = vld [vmem:[#allocation6] sm:$0xff]
    %v93 = vld [vmem:[#allocation6 + $0x8] sm:$0xff]
    %v94 = vld [vmem:[#allocation6 + $0x10] sm:$0xff]
    %v95 = vld [vmem:[#allocation6 + $0x18] sm:$0xff]
    %v96 = vld [vmem:[#allocation6 + $0x20] sm:$0xff]
    %v97 = vld [vmem:[#allocation6 + $0x28] sm:$0xff]
    %v98 = vld [vmem:[#allocation6 + $0x30] sm:$0xff]
    %v99 = vld [vmem:[#allocation6 + $0x38] sm:$0xff]
    %v100 = vld [vmem:[#allocation6 + $0x40] sm:$0xff]
    %v101 = vld [vmem:[#allocation6 + $0x48] sm:$0xff]
    %v102 = vld [vmem:[#allocation6 + $0x50] sm:$0xff]
    %v103 = vld [vmem:[#allocation6 + $0x58] sm:$0xff]
    %v104 = vld [vmem:[#allocation6 + $0x60] sm:$0xff]
    %v105 = vld [vmem:[#allocation6 + $0x68] sm:$0xff]
    %v106 = vld [vmem:[#allocation6 + $0x70] sm:$0xff]
    %v107 = vld [vmem:[#allocation6 + $0x78] sm:$0xff]
    %108 = vmatprep.subr.mxu0 0.0
    %109 = vmatpush1.msra.mxu0 %v107
    %110 = vmatprep.subr.mxu0 0.0
    %111 = vmatpush1.msra.mxu0 %v106
    %112 = vmatprep.subr.mxu0 0.0
    %113 = vmatpush1.msra.mxu0 %v105
    %114 = vmatprep.subr.mxu0 0.0
    %115 = vmatpush1.msra.mxu0 %v104
    %116 = vmatprep.subr.mxu0 0.0
    %117 = vmatpush1.msra.mxu0 %v103
    %118 = vmatprep.subr.mxu0 0.0
    %119 = vmatpush1.msra.mxu0 %v102
    %120 = vmatprep.subr.mxu0 0.0
    %121 = vmatpush1.msra.mxu0 %v101
    %122 = vmatprep.subr.mxu0 0.0
    %123 = vmatpush1.msra.mxu0 %v100
    %124 = vmatprep.subr.mxu0 0.0
    %125 = vmatpush1.msra.mxu0 %v99
    %126 = vmatprep.subr.mxu0 0.0
    %127 = vmatpush1.msra.mxu0 %v98
    %128 = vmatprep.subr.mxu0 0.0
    %129 = vmatpush1.msra.mxu0 %v97
    %130 = vmatprep.subr.mxu0 0.0
    %131 = vmatpush1.msra.mxu0 %v96
    %132 = vmatprep.subr.mxu0 0.0
    %133 = vmatpush1.msra.mxu0 %v95
    %134 = vmatprep.subr.mxu0 0.0
    %135 = vmatpush1.msra.mxu0 %v94
    %136 = vmatprep.subr.mxu0 0.0
    %137 = vmatpush1.msra.mxu0 %v93
    %138 = vmatprep.subr.mxu0 0.0
    %139 = vmatpush1.msra.mxu0 %v92
    %140 = vmatprep.subr.mxu0 0.0
    %141 = vmatpush2.msra.mxu0 0.0
    %142 = vmatprep.subr.mxu0 0.0
    %143 = vmatpush2.msra.mxu0 0.0
    %144 = vmatprep.subr.mxu0 0.0
    %145 = vmatpush2.msra.mxu0 0.0
    %146 = vmatprep.subr.mxu0 0.0
    %147 = vmatpush2.msra.mxu0 0.0
    %148 = vmatprep.subr.mxu0 0.0
    %149 = vmatpush2.msra.mxu0 0.0
    %150 = vmatprep.subr.mxu0 0.0
    %151 = vmatpush2.msra.mxu0 0.0
    %152 = vmatprep.subr.mxu0 0.0
    %153 = vmatpush2.msra.mxu0 0.0
    %154 = vmatprep.subr.mxu0 0.0
    %155 = vmatpush2.msra.mxu0 0.0
    %156 = vmatprep.subr.mxu0 0.0
    %157 = vmatpush2.msra.mxu0 0.0
    %158 = vmatprep.subr.mxu0 0.0
    %159 = vmatpush2.msra.mxu0 0.0
    %160 = vmatprep.subr.mxu0 0.0
    %161 = vmatpush2.msra.mxu0 0.0
    %162 = vmatprep.subr.mxu0 0.0
    %163 = vmatpush2.msra.mxu0 0.0
    %164 = vmatprep.subr.mxu0 0.0
    %165 = vmatpush2.msra.mxu0 0.0
    %166 = vmatprep.subr.mxu0 0.0
    %167 = vmatpush2.msra.mxu0 0.0
    %168 = vmatprep.subr.mxu0 0.0
    %169 = vmatpush2.msra.mxu0 0.0
    %170 = vmatprep.subr.mxu0 0.0
    %171 = vmatpush2.msra.mxu0 0.0
    %172 = vmatprep.mubr.f32.mxu0 0.0
    %173 = vmatmul.mubr.f32.gmra.mxu0 %v76
    %v174 = vpop.f32.mrf.mxu0
    %v175 = vadd.f32 0.0, %v174
    %v176 = vpop.f32.mrf.mxu0
    %177 = vmatprep.mubr.f32.mxu0 0.0
    %178 = vmatmul.mubr.f32.gmra.mxu0 %v77
    %v179 = vpop.f32.mrf.mxu0
    %v180 = vadd.f32 0.0, %v179
    %v181 = vpop.f32.mrf.mxu0
    %182 = vmatprep.mubr.f32.mxu0 0.0
    %183 = vmatmul.mubr.f32.gmra.mxu0 %v78
    %v184 = vpop.f32.mrf.mxu0
    %v185 = vadd.f32 0.0, %v184
    %v186 = vpop.f32.mrf.mxu0
    %187 = vmatprep.mubr.f32.mxu0 0.0
    %188 = vmatmul.mubr.f32.gmra.mxu0 %v79
    %v189 = vpop.f32.mrf.mxu0
    %v190 = vadd.f32 0.0, %v189
    %v191 = vpop.f32.mrf.mxu0
    %192 = vmatprep.mubr.f32.mxu0 0.0
    %193 = vmatmul.mubr.f32.gmra.mxu0 %v80
    %v194 = vpop.f32.mrf.mxu0
    %v195 = vadd.f32 0.0, %v194
    %v196 = vpop.f32.mrf.mxu0
    %197 = vmatprep.mubr.f32.mxu0 0.0
    %198 = vmatmul.mubr.f32.gmra.mxu0 %v81
    %v199 = vpop.f32.mrf.mxu0
    %v200 = vadd.f32 0.0, %v199
    %v201 = vpop.f32.mrf.mxu0
    %202 = vmatprep.mubr.f32.mxu0 0.0
    %203 = vmatmul.mubr.f32.gmra.mxu0 %v82
    %v204 = vpop.f32.mrf.mxu0
    %v205 = vadd.f32 0.0, %v204
    %v206 = vpop.f32.mrf.mxu0
    %207 = vmatprep.mubr.f32.mxu0 0.0
    %208 = vmatmul.mubr.f32.gmra.mxu0 %v83
    %v209 = vpop.f32.mrf.mxu0
    %v210 = vadd.f32 0.0, %v209
    %v211 = vpop.f32.mrf.mxu0
    %212 = vmatprep.mubr.f32.mxu0 0.0
    %213 = vmatmul.mubr.f32.gmra.mxu0 %v84
    %v214 = vpop.f32.mrf.mxu0
    %v215 = vadd.f32 0.0, %v214
    %v216 = vpop.f32.mrf.mxu0
    %217 = vmatprep.mubr.f32.mxu0 0.0
    %218 = vmatmul.mubr.f32.gmra.mxu0 %v85
    %v219 = vpop.f32.mrf.mxu0
    %v220 = vadd.f32 0.0, %v219
    %v221 = vpop.f32.mrf.mxu0
    %222 = vmatprep.mubr.f32.mxu0 0.0
    %223 = vmatmul.mubr.f32.gmra.mxu0 %v86
    %v224 = vpop.f32.mrf.mxu0
    %v225 = vadd.f32 0.0, %v224
    %v226 = vpop.f32.mrf.mxu0
    %227 = vmatprep.mubr.f32.mxu0 0.0
    %228 = vmatmul.mubr.f32.gmra.mxu0 %v87
    %v229 = vpop.f32.mrf.mxu0
    %v230 = vadd.f32 0.0, %v229
    %v231 = vpop.f32.mrf.mxu0
    %232 = vmatprep.mubr.f32.mxu0 0.0
    %233 = vmatmul.mubr.f32.gmra.mxu0 %v88
    %v234 = vpop.f32.mrf.mxu0
    %v235 = vadd.f32 0.0, %v234
    %v236 = vpop.f32.mrf.mxu0
    %237 = vmatprep.mubr.f32.mxu0 0.0
    %238 = vmatmul.mubr.f32.gmra.mxu0 %v89
    %v239 = vpop.f32.mrf.mxu0
    %v240 = vadd.f32 0.0, %v239
    %v241 = vpop.f32.mrf.mxu0
    %242 = vmatprep.mubr.f32.mxu0 0.0
    %243 = vmatmul.mubr.f32.gmra.mxu0 %v90
    %v244 = vpop.f32.mrf.mxu0
    %v245 = vadd.f32 0.0, %v244
    %v246 = vpop.f32.mrf.mxu0
    %247 = vmatprep.mubr.f32.mxu0 0.0
    %248 = vmatmul.mubr.f32.gmra.mxu0 %v91
    %v249 = vpop.f32.mrf.mxu0
    %v250 = vadd.f32 0.0, %v249
    %v251 = vpop.f32.mrf.mxu0
    %252 = vdwg.mxu0
    %v253 = vadd.f32 %v60, %v175
    %v254 = vadd.f32 %v61, %v180
    %v255 = vadd.f32 %v62, %v185
    %v256 = vadd.f32 %v63, %v190
    %v257 = vadd.f32 %v64, %v195
    %v258 = vadd.f32 %v65, %v200
    %v259 = vadd.f32 %v66, %v205
    %v260 = vadd.f32 %v67, %v210
    %v261 = vadd.f32 %v68, %v215
    %v262 = vadd.f32 %v69, %v220
    %v263 = vadd.f32 %v70, %v225
    %v264 = vadd.f32 %v71, %v230
    %v265 = vadd.f32 %v72, %v235
    %v266 = vadd.f32 %v73, %v240
    %v267 = vadd.f32 %v74, %v245
    %v268 = vadd.f32 %v75, %v250
    %269 = vst [vmem:[#allocation2] sm:$0xff] %v253
    %270 = vst [vmem:[#allocation2 + $0x8] sm:$0xff] %v254
    %271 = vst [vmem:[#allocation2 + $0x10] sm:$0xff] %v255
    %272 = vst [vmem:[#allocation2 + $0x18] sm:$0xff] %v256
    %273 = vst [vmem:[#allocation2 + $0x20] sm:$0xff] %v257
    %274 = vst [vmem:[#allocation2 + $0x28] sm:$0xff] %v258
    %275 = vst [vmem:[#allocation2 + $0x30] sm:$0xff] %v259
    %276 = vst [vmem:[#allocation2 + $0x38] sm:$0xff] %v260
    %277 = vst [vmem:[#allocation2 + $0x40] sm:$0xff] %v261
    %278 = vst [vmem:[#allocation2 + $0x48] sm:$0xff] %v262
    %279 = vst [vmem:[#allocation2 + $0x50] sm:$0xff] %v263
    %280 = vst [vmem:[#allocation2 + $0x58] sm:$0xff] %v264
    %281 = vst [vmem:[#allocation2 + $0x60] sm:$0xff] %v265
    %282 = vst [vmem:[#allocation2 + $0x68] sm:$0xff] %v266
    %283 = vst [vmem:[#allocation2 + $0x70] sm:$0xff] %v267
    %284 = vst [vmem:[#allocation2 + $0x78] sm:$0xff] %v268
    // Predicated region
    $region22: #{tpu_custom_call.1} parent=1 // pred_check
      %p285 = pneg %p40
    $region23: #{tpu_custom_call.1} parent=1 // pred_check_branch
      %287 = sbr.rel (%p285) target = $region25
    $region24: #{tpu_custom_call.1} parent=1 // pred_region
      %v288 = vld [vmem:[#allocation2] sm:$0xff]
      %v289 = vld [vmem:[#allocation2 + $0x8] sm:$0xff]
      %v290 = vld [vmem:[#allocation2 + $0x10] sm:$0xff]
      %v291 = vld [vmem:[#allocation2 + $0x18] sm:$0xff]
      %v292 = vld [vmem:[#allocation2 + $0x20] sm:$0xff]
      %v293 = vld [vmem:[#allocation2 + $0x28] sm:$0xff]
      %v294 = vld [vmem:[#allocation2 + $0x30] sm:$0xff]
      %v295 = vld [vmem:[#allocation2 + $0x38] sm:$0xff]
      %v296 = vld [vmem:[#allocation2 + $0x40] sm:$0xff]
      %v297 = vld [vmem:[#allocation2 + $0x48] sm:$0xff]
      %v298 = vld [vmem:[#allocation2 + $0x50] sm:$0xff]
      %v299 = vld [vmem:[#allocation2 + $0x58] sm:$0xff]
      %v300 = vld [vmem:[#allocation2 + $0x60] sm:$0xff]
      %v301 = vld [vmem:[#allocation2 + $0x68] sm:$0xff]
      %v302 = vld [vmem:[#allocation2 + $0x70] sm:$0xff]
      %v303 = vld [vmem:[#allocation2 + $0x78] sm:$0xff]
      %304 = vst [vmem:[#allocation8] sm:$0xff] %v288
      %305 = vst [vmem:[#allocation8 + $0x8] sm:$0xff] %v289
      %306 = vst [vmem:[#allocation8 + $0x10] sm:$0xff] %v290
      %307 = vst [vmem:[#allocation8 + $0x18] sm:$0xff] %v291
      %308 = vst [vmem:[#allocation8 + $0x20] sm:$0xff] %v292
      %309 = vst [vmem:[#allocation8 + $0x28] sm:$0xff] %v293
      %310 = vst [vmem:[#allocation8 + $0x30] sm:$0xff] %v294
      %311 = vst [vmem:[#allocation8 + $0x38] sm:$0xff] %v295
      %312 = vst [vmem:[#allocation8 + $0x40] sm:$0xff] %v296
      %313 = vst [vmem:[#allocation8 + $0x48] sm:$0xff] %v297
      %314 = vst [vmem:[#allocation8 + $0x50] sm:$0xff] %v298
      %315 = vst [vmem:[#allocation8 + $0x58] sm:$0xff] %v299
      %316 = vst [vmem:[#allocation8 + $0x60] sm:$0xff] %v300
      %317 = vst [vmem:[#allocation8 + $0x68] sm:$0xff] %v301
      %318 = vst [vmem:[#allocation8 + $0x70] sm:$0xff] %v302
      %319 = vst [vmem:[#allocation8 + $0x78] sm:$0xff] %v303
    $region25: #{tpu_custom_call.1} parent=1 // pred_fallthru
      _
    // Predicated region
    $region26: #{tpu_custom_call.1} parent=1 // pred_check
      _
    $region27: #{tpu_custom_call.1} parent=1 // pred_check_branch
      %321 = sbr.rel (0) target = $region29
    $region28: #{tpu_custom_call.1} parent=1 // pred_region
      %s323 = ssub.s32 2048, 2048
      %324 = vsyncadd [#allocation5], %s323
      %s325 = sshll.u32 [#allocation8], 4
      %s326 = int_to_ptr.vmem [resolvable:$true] %s325
      %331 = dma.vmem_to_hbm [thread:$0]  %s326, 2048, %s2, [#allocation5], 128, 128, 8
    $region29: #{tpu_custom_call.1} parent=1 // pred_fallthru
      _
    // Predicated region
    $region30: #{tpu_custom_call.1} parent=1 // pred_check
      _
    $region31: #{tpu_custom_call.1} parent=1 // pred_check_branch
      %333 = sbr.rel (0) target = $region33
    $region32: #{tpu_custom_call.1} parent=1 // pred_region
      %334 = dma.done [#allocation5], 2048
    $region33: #{tpu_custom_call.1} parent=1 // pred_fallthru
      _
    %335 = vsyncpa [#allocation4], 1
    %336 = vsyncpa [#allocation7], 1
    %337 = vsyncpa [#allocation5], 1

</llo_original>
